<compile_context>
chip_gen: v7x
topology: tpu7x:2x2x1
jax: 0.10.0
libtpu: 0.0.40
codegen_flags: <defaults>
</compile_context>

<pallas_src>
import jax
import jax.numpy as jnp
from jax.experimental import pallas as pl
from jax.experimental.pallas import tpu as pltpu


def _round_up(x, m):
    return (x + m - 1) // m * m


def _selector_head_kernel(past_ref, w1p_ref, base_ref, w2_ref, b2_ref, out_ref):
    # past_ref: [TILE_N, H]  tile of past CLS embeddings (streamed input dtype)
    # w1p_ref : [H, H]       first-layer weight, "past" half (matmul dtype)
    # base_ref: [1, H]  f32  effective bias = cur @ W1_cur + b1 (hoisted)
    # w2_ref  : [1, H]  f32  second-layer weight as a lane-dense row
    # b2_ref  : [1]     f32  (SMEM scalar)
    # out_ref : [TILE_N, 1]  f32 probabilities for this tile

    # Cast the streamed tile to the matmul dtype in-kernel (VPU) so the
    # wrapper never does a separate whole-array HBM pass for the cast.
    past = past_ref[...].astype(w1p_ref.dtype)

    # First layer ("past" half) on the MXU with f32 accumulation; the
    # "current" half + b1 arrive pre-folded in base_ref.
    hid = jnp.dot(past, w1p_ref[...],
                  preferred_element_type=jnp.float32) + base_ref[...]
    hid = jnp.maximum(hid, 0.0)                                     # [TILE_N, H]

    # Second layer (H -> 1): VPU multiply by the lane-dense w2 row + per-row
    # lane reduce.  No transpose, no 1-output-column MXU matmul.
    logits = jnp.sum(hid * w2_ref[...], axis=-1, keepdims=True)     # [TILE_N, 1]
    out_ref[...] = jax.nn.sigmoid(logits + b2_ref[0])


def _pick_tile_n(n):
    # Single block for small N; otherwise prefer >=256-row tiles for the
    # 256x256 MXU (v6e/v7x) while keeping >=2 grid steps so v7x's two
    # TensorCores both get work; 512-row tiles for large N.
    if n <= 256:
        return n
    return min(512, _round_up(pl.cdiv(n, 2), 8))


def selector_head(current_emb, past_embs, w1, b1, w2, b2, *,
                  tile_n=None, matmul_dtype=jnp.bfloat16):
    """current_emb: [1, H]; past_embs: [N, H] -> probabilities [N] (f32)."""
    n, h = past_embs.shape
    if n == 0:
        # Matches `return torch.empty(0)` for an empty past list.
        return jnp.zeros((0,), jnp.float32)

    if tile_n is None:
        tile_n = _pick_tile_n(n)
    # Sublane rule: block rows must be a multiple of 8 or span the full dim.
    assert tile_n == n or tile_n % 8 == 0
    grid_n = pl.cdiv(n, tile_n)

    # Effective bias hoisted out of the kernel: base = cur @ W1_cur + b1.
    # One tiny [1,H]x[H,H] matmul in XLA instead of one per grid step.
    base = (jnp.dot(current_emb.astype(jnp.float32), w1[:h].astype(jnp.float32))
            + b1.reshape(1, h).astype(jnp.float32))                  # [1, H] f32
    w1_past = w1[h:].astype(matmul_dtype)                            # [H, H]
    w2_row = w2.reshape(1, h).astype(jnp.float32)                    # lane-dense
    b2_s = b2.reshape(1).astype(jnp.float32)

    in_bytes = jnp.dtype(past_embs.dtype).itemsize
    mm_bytes = jnp.dtype(matmul_dtype).itemsize

    # Per-step VMEM footprint: double-buffered past tile, resident weights,
    # f32 intermediates, lane-padded [tile_n, 1] output blocks, plus headroom.
    footprint = (2 * tile_n * h * in_bytes              # past tile x2 buffers
                 + 2 * h * h * mm_bytes                 # W1_past (worst case x2)
                 + 4 * _round_up(h, 128) * 4            # base + w2 rows
                 + 2 * tile_n * 128 * 4                 # out block (lane-padded) x2
                 + 2 * tile_n * h * 4)                  # f32 hid intermediate + slack
    vmem_limit = int(min(64 << 20, max(32 << 20, 2 * footprint)))

    cost = pl.CostEstimate(
        flops=2 * n * h * h + 3 * n * h,
        transcendentals=2 * n,                          # exp + reciprocal / sigmoid
        bytes_accessed=(n * h * in_bytes + h * h * mm_bytes
                        + (2 * h + 1) * 4 + n * 4),
    )

    def build(resident_bufs):
        if resident_bufs is None:
            const_spec = lambda shape: pl.BlockSpec(shape, lambda i: (0, 0))
        else:
            const_spec = lambda shape: pl.BlockSpec(
                shape, lambda i: (0, 0),
                pipeline_mode=pl.Buffered(resident_bufs))
        return pl.pallas_call(
            _selector_head_kernel,
            out_shape=jax.ShapeDtypeStruct((n, 1), jnp.float32),
            grid=(grid_n,),
            in_specs=[
                pl.BlockSpec((tile_n, h), lambda i: (i, 0)),         # past tile
                const_spec((h, h)),                                  # W1_past
                const_spec((1, h)),                                  # base (eff. bias)
                const_spec((1, h)),                                  # w2 row
                pl.BlockSpec(memory_space=pltpu.MemorySpace.SMEM),   # b2 scalar
            ],
            out_specs=pl.BlockSpec((tile_n, 1), lambda i: (i, 0)),
            compiler_params=pltpu.CompilerParams(
                dimension_semantics=("parallel",),
                vmem_limit_bytes=vmem_limit),
            cost_estimate=cost,
        )

    args = (past_embs, w1_past, base, w2_row, b2_s)
    try:
        # Constant-index_map blocks never change: single-buffer them so the
        # default double buffering does not waste VMEM on resident weights.
        out = build(1)(*args)
    except Exception:
        # Fallback: default buffering if Buffered(1) is rejected by this jax.
        out = build(None)(*args)

    # torch.cat(probabilities).squeeze(-1)
    return out[:, 0]


def selector_head_ref(current_emb, past_embs, w1, b1, w2, b2):
    n, h = past_embs.shape
    combined = jnp.concatenate(
        [jnp.broadcast_to(current_emb, (n, h)), past_embs], axis=-1)
    hid = jnp.maximum(combined @ w1 + b1.reshape(1, h), 0.0)
    return jax.nn.sigmoid(hid @ w2.reshape(h, 1) + b2.reshape(1, 1))[:, 0]


if __name__ == "__main__":
    # Small shapes: hidden_size=128 (stands in for 768), N=8 past texts.
    H = 128
    N = 8

    key = jax.random.PRNGKey(0)
    k_cur, k_past, k_w1, k_b1, k_w2, k_b2 = jax.random.split(key, 6)

    # Synthetic "CLS" embeddings (the BERT encoder is not translatable).
    current_emb = jax.random.normal(k_cur, (1, H), dtype=jnp.float32)
    past_embs = jax.random.normal(k_past, (N, H), dtype=jnp.float32)

    # Classification-head parameters, stored pre-transposed [in, out]:
    #   nn.Linear(2H, H): weight [H, 2H], bias [H]  ->  w1 [2H, H], b1 [H]
    #   nn.Linear(H, 1) : weight [1, H],  bias [1]  ->  w2 [H, 1],  b2 [1]
    w1 = jax.random.normal(k_w1, (2 * H, H), dtype=jnp.float32) * 0.02
    b1 = jax.random.normal(k_b1, (H,), dtype=jnp.float32) * 0.02
    w2 = jax.random.normal(k_w2, (H, 1), dtype=jnp.float32) * 0.02
    b2 = jax.random.normal(k_b2, (1,), dtype=jnp.float32) * 0.02

    ref = selector_head_ref(current_emb, past_embs, w1, b1, w2, b2)

    # f32 MXU-operand path: near-exact vs the pure-JAX reference.
    probs_f32 = selector_head(current_emb, past_embs, w1, b1, w2, b2,
                              matmul_dtype=jnp.float32)
    jax.block_until_ready(probs_f32)
    assert probs_f32.shape == (N,)
    assert jnp.allclose(probs_f32, ref, atol=1e-4, rtol=1e-4)

    # bf16 MXU-operand path (v6e/v7x recommendation), f32 accumulation.
    probs_bf16 = selector_head(current_emb, past_embs, w1, b1, w2, b2,
                               matmul_dtype=jnp.bfloat16)
    jax.block_until_ready(probs_bf16)
    assert probs_bf16.shape == (N,)
    assert jnp.allclose(probs_bf16, ref, atol=5e-3, rtol=5e-3)

    # Multi-step grid with a ragged last tile (N=20, tile_n=8 -> 3 steps).
    N2 = 20
    past2 = jax.random.normal(jax.random.PRNGKey(1), (N2, H), dtype=jnp.float32)
    ref2 = selector_head_ref(current_emb, past2, w1, b1, w2, b2)
    probs2 = selector_head(current_emb, past2, w1, b1, w2, b2,
                           tile_n=8, matmul_dtype=jnp.float32)
    jax.block_until_ready(probs2)
    assert probs2.shape == (N2,)
    assert jnp.allclose(probs2, ref2, atol=1e-4, rtol=1e-4)

    # Empty past list -> torch.empty(0) semantics.
    empty = selector_head(current_emb, jnp.zeros((0, H), jnp.float32),
                          w1, b1, w2, b2)
    assert empty.shape == (0,)

    print("KERNEL_OK")
</pallas_src>

<mosaic_0001>
module attributes {stable_mosaic.version = 11 : i64} {
  func.func @_selector_head_kernel(%arg0: i32, %arg1: memref<8x128xf32, #tpu.memory_space<vmem>>, %arg2: memref<128x128xf32, #tpu.memory_space<vmem>>, %arg3: memref<1x128xf32, #tpu.memory_space<vmem>>, %arg4: memref<1x128xf32, #tpu.memory_space<vmem>>, %arg5: memref<1xf32, #tpu.memory_space<smem>>, %arg6: memref<8x1xf32, #tpu.memory_space<vmem>>) attributes {dimension_semantics = [#tpu.dimension_semantics<parallel>], iteration_bounds = array<i64: 1>, scalar_prefetch = 0 : i64, scratch_operands = 0 : i64, tpu.core_type = #tpu.core_type<tc>, window_params = [{transform_indices = @transform_0, window_bounds = array<i64: 8, 128>}, {pipeline_mode = #tpu.pipeline_mode<synchronous>, transform_indices = @transform_1, window_bounds = array<i64: 128, 128>}, {pipeline_mode = #tpu.pipeline_mode<synchronous>, transform_indices = @transform_2, window_bounds = array<i64: 1, 128>}, {pipeline_mode = #tpu.pipeline_mode<synchronous>, transform_indices = @transform_3, window_bounds = array<i64: 1, 128>}, {transform_indices = @transform_4, window_bounds = array<i64: 1>}, {transform_indices = @transform_5, window_bounds = array<i64: 8, 1>}]} {
    %c0 = arith.constant 0 : index
    %c0_0 = arith.constant 0 : index
    %0 = vector.load %arg1[%c0, %c0_0] : memref<8x128xf32, #tpu.memory_space<vmem>>, vector<8x128xf32>
    %c0_1 = arith.constant 0 : index
    %c0_2 = arith.constant 0 : index
    %1 = vector.load %arg2[%c0_1, %c0_2] : memref<128x128xf32, #tpu.memory_space<vmem>>, vector<128x128xf32>
    %cst = arith.constant dense<0.000000e+00> : vector<8x128xf32>
    %2 = tpu.matmul %0, %1, %cst {dimension_numbers = #tpu.dot_dimension_numbers<[1], [0], [0], [1], [0, 0, 1, 1], [], []>} : vector<8x128xf32>, vector<128x128xf32>, vector<8x128xf32> -> vector<8x128xf32>
    %c0_3 = arith.constant 0 : index
    %c0_4 = arith.constant 0 : index
    %3 = vector.load %arg3[%c0_3, %c0_4] : memref<1x128xf32, #tpu.memory_space<vmem>>, vector<1x128xf32>
    %4 = vector.broadcast %3 : vector<1x128xf32> to vector<8x128xf32>
    %5 = arith.addf %2, %4 : vector<8x128xf32>
    %cst_5 = arith.constant 0.000000e+00 : f32
    %6 = vector.broadcast %cst_5 : f32 to vector<8x128xf32>
    %7 = arith.maximumf %5, %6 : vector<8x128xf32>
    %c0_6 = arith.constant 0 : index
    %c0_7 = arith.constant 0 : index
    %8 = vector.load %arg4[%c0_6, %c0_7] : memref<1x128xf32, #tpu.memory_space<vmem>>, vector<1x128xf32>
    %9 = vector.broadcast %8 : vector<1x128xf32> to vector<8x128xf32>
    %10 = arith.mulf %7, %9 : vector<8x128xf32>
    %cst_8 = arith.constant dense<0.000000e+00> : vector<8xf32>
    %11 = vector.multi_reduction <add>, %10, %cst_8 [1] : vector<8x128xf32> to vector<8xf32>
    %12 = vector.shape_cast %11 : vector<8xf32> to vector<8x1xf32>
    %c0_9 = arith.constant 0 : index
    %13 = memref.load %arg5[%c0_9] : memref<1xf32, #tpu.memory_space<smem>>
    %14 = vector.broadcast %13 : f32 to vector<8x1xf32>
    %15 = arith.addf %12, %14 : vector<8x1xf32>
    %16 = arith.negf %15 : vector<8x1xf32>
    %17 = math.exp %16 : vector<8x1xf32>
    %cst_10 = arith.constant 1.000000e+00 : f32
    %18 = vector.broadcast %cst_10 : f32 to vector<8x1xf32>
    %19 = arith.addf %18, %17 : vector<8x1xf32>
    %20 = arith.divf %18, %19 : vector<8x1xf32>
    %c0_11 = arith.constant 0 : index
    %c0_12 = arith.constant 0 : index
    %21 = vector.load %arg6[%c0_11, %c0_12] : memref<8x1xf32, #tpu.memory_space<vmem>>, vector<8x1xf32>
    tpu.vector_store %arg6[%c0_11, %c0_12], %20 {strides = array<i32>} : memref<8x1xf32, #tpu.memory_space<vmem>>, vector<8x1xf32>,
    return
  }
  func.func @transform_0(%arg0: i32) -> (i32, i32) {
    %c0_i32 = arith.constant 0 : i32
    %c0_i32_0 = arith.constant 0 : i32
    return %arg0, %c0_i32 : i32, i32
  }
  func.func @transform_1(%arg0: i32) -> (i32, i32) {
    %c0_i32 = arith.constant 0 : i32
    %c0_i32_0 = arith.constant 0 : i32
    %c0_i32_1 = arith.constant 0 : i32
    return %c0_i32, %c0_i32_0 : i32, i32
  }
  func.func @transform_2(%arg0: i32) -> (i32, i32) {
    %c0_i32 = arith.constant 0 : i32
    %c0_i32_0 = arith.constant 0 : i32
    %c0_i32_1 = arith.constant 0 : i32
    return %c0_i32, %c0_i32_0 : i32, i32
  }
  func.func @transform_3(%arg0: i32) -> (i32, i32) {
    %c0_i32 = arith.constant 0 : i32
    %c0_i32_0 = arith.constant 0 : i32
    %c0_i32_1 = arith.constant 0 : i32
    return %c0_i32, %c0_i32_0 : i32, i32
  }
  func.func @transform_4(%arg0: i32) -> i32 {
    %c0_i32 = arith.constant 0 : i32
    %c0_i32_0 = arith.constant 0 : i32
    return %c0_i32 : i32
  }
  func.func @transform_5(%arg0: i32) -> (i32, i32) {
    %c0_i32 = arith.constant 0 : i32
    %c0_i32_0 = arith.constant 0 : i32
    return %arg0, %c0_i32 : i32, i32
  }
}

module attributes {stable_mosaic.version = 11 : i64} {
  func.func @_selector_head_kernel(%arg0: i32, %arg1: memref<8x128xf32, #tpu.memory_space<vmem>>, %arg2: memref<128x128xf32, #tpu.memory_space<vmem>>, %arg3: memref<1x128xf32, #tpu.memory_space<vmem>>, %arg4: memref<1x128xf32, #tpu.memory_space<vmem>>, %arg5: memref<1xf32, #tpu.memory_space<smem>>, %arg6: memref<8x1xf32, #tpu.memory_space<vmem>>) attributes {dimension_semantics = [#tpu.dimension_semantics<parallel>], iteration_bounds = array<i64: 1>, scalar_prefetch = 0 : i64, scratch_operands = 0 : i64, tpu.core_type = #tpu.core_type<tc>, window_params = [{transform_indices = @transform_0, window_bounds = array<i64: 8, 128>}, {pipeline_mode = #tpu.pipeline_mode<synchronous>, transform_indices = @transform_1, window_bounds = array<i64: 128, 128>}, {pipeline_mode = #tpu.pipeline_mode<synchronous>, transform_indices = @transform_2, window_bounds = array<i64: 1, 128>}, {pipeline_mode = #tpu.pipeline_mode<synchronous>, transform_indices = @transform_3, window_bounds = array<i64: 1, 128>}, {transform_indices = @transform_4, window_bounds = array<i64: 1>}, {transform_indices = @transform_5, window_bounds = array<i64: 8, 1>}]} {
    %c0 = arith.constant 0 : index
    %c0_0 = arith.constant 0 : index
    %0 = vector.load %arg1[%c0, %c0_0] : memref<8x128xf32, #tpu.memory_space<vmem>>, vector<8x128xf32>
    %c0_1 = arith.constant 0 : index
    %c0_2 = arith.constant 0 : index
    %1 = vector.load %arg2[%c0_1, %c0_2] : memref<128x128xf32, #tpu.memory_space<vmem>>, vector<128x128xf32>
    %cst = arith.constant dense<0.000000e+00> : vector<8x128xf32>
    %2 = tpu.matmul %0, %1, %cst {dimension_numbers = #tpu.dot_dimension_numbers<[1], [0], [0], [1], [0, 0, 1, 1], [], []>} : vector<8x128xf32>, vector<128x128xf32>, vector<8x128xf32> -> vector<8x128xf32>
    %c0_3 = arith.constant 0 : index
    %c0_4 = arith.constant 0 : index
    %3 = vector.load %arg3[%c0_3, %c0_4] : memref<1x128xf32, #tpu.memory_space<vmem>>, vector<1x128xf32>
    %4 = vector.broadcast %3 : vector<1x128xf32> to vector<8x128xf32>
    %5 = arith.addf %2, %4 : vector<8x128xf32>
    %cst_5 = arith.constant 0.000000e+00 : f32
    %6 = vector.broadcast %cst_5 : f32 to vector<8x128xf32>
    %7 = arith.maximumf %5, %6 : vector<8x128xf32>
    %c0_6 = arith.constant 0 : index
    %c0_7 = arith.constant 0 : index
    %8 = vector.load %arg4[%c0_6, %c0_7] : memref<1x128xf32, #tpu.memory_space<vmem>>, vector<1x128xf32>
    %9 = vector.broadcast %8 : vector<1x128xf32> to vector<8x128xf32>
    %10 = arith.mulf %7, %9 : vector<8x128xf32>
    %cst_8 = arith.constant dense<0.000000e+00> : vector<8xf32>
    %11 = vector.multi_reduction <add>, %10, %cst_8 [1] : vector<8x128xf32> to vector<8xf32>
    %12 = vector.shape_cast %11 : vector<8xf32> to vector<8x1xf32>
    %c0_9 = arith.constant 0 : index
    %13 = memref.load %arg5[%c0_9] : memref<1xf32, #tpu.memory_space<smem>>
    %14 = vector.broadcast %13 : f32 to vector<8x1xf32>
    %15 = arith.addf %12, %14 : vector<8x1xf32>
    %16 = arith.negf %15 : vector<8x1xf32>
    %17 = math.exp %16 : vector<8x1xf32>
    %cst_10 = arith.constant 1.000000e+00 : f32
    %18 = vector.broadcast %cst_10 : f32 to vector<8x1xf32>
    %19 = arith.addf %18, %17 : vector<8x1xf32>
    %20 = arith.divf %18, %19 : vector<8x1xf32>
    %c0_11 = arith.constant 0 : index
    %c0_12 = arith.constant 0 : index
    %21 = vector.load %arg6[%c0_11, %c0_12] : memref<8x1xf32, #tpu.memory_space<vmem>>, vector<8x1xf32>
    tpu.vector_store %arg6[%c0_11, %c0_12], %20 {strides = array<i32>} : memref<8x1xf32, #tpu.memory_space<vmem>>, vector<8x1xf32>,
    return
  }
  func.func @transform_0(%arg0: i32) -> (i32, i32) {
    %c0_i32 = arith.constant 0 : i32
    %c0_i32_0 = arith.constant 0 : i32
    return %arg0, %c0_i32 : i32, i32
  }
  func.func @transform_1(%arg0: i32) -> (i32, i32) {
    %c0_i32 = arith.constant 0 : i32
    %c0_i32_0 = arith.constant 0 : i32
    %c0_i32_1 = arith.constant 0 : i32
    return %c0_i32, %c0_i32_0 : i32, i32
  }
  func.func @transform_2(%arg0: i32) -> (i32, i32) {
    %c0_i32 = arith.constant 0 : i32
    %c0_i32_0 = arith.constant 0 : i32
    %c0_i32_1 = arith.constant 0 : i32
    return %c0_i32, %c0_i32_0 : i32, i32
  }
  func.func @transform_3(%arg0: i32) -> (i32, i32) {
    %c0_i32 = arith.constant 0 : i32
    %c0_i32_0 = arith.constant 0 : i32
    %c0_i32_1 = arith.constant 0 : i32
    return %c0_i32, %c0_i32_0 : i32, i32
  }
  func.func @transform_4(%arg0: i32) -> i32 {
    %c0_i32 = arith.constant 0 : i32
    %c0_i32_0 = arith.constant 0 : i32
    return %c0_i32 : i32
  }
  func.func @transform_5(%arg0: i32) -> (i32, i32) {
    %c0_i32 = arith.constant 0 : i32
    %c0_i32_0 = arith.constant 0 : i32
    return %arg0, %c0_i32 : i32, i32
  }
}

</mosaic_0001>

<llo_original>
// kernel: tpu_custom_call.1
$region0: #{tpu_custom_call.1}
  #allocation0 [shape = 'u32[]', space=smem, size = 0x4, offset = 0x4, fixed_abs, tag = 'smem constant byte address 0x4 - core index']
  #allocation1 [shape = 'u32[144,128]{1,0:T(1,128)}', space=vmem, size = 0x12000, scoped, tag = 'internal scratch']
  #allocation2 [shape = 'f32[1]{0:T(128)S(6)}', space=smem, size = 0x200, scoped, tag = 'scoped memory for tpu_custom_call.1']
  %s0 = inlined_call_operand.hbm [shape: f32[8,128], index: 0, kind: input, shape index: {}]
  %s1 = inlined_call_operand.hbm [shape: f32[128,128], index: 1, kind: input, shape index: {}]
  %s2 = inlined_call_operand.vmem [shape: f32[1,128], index: 2, kind: input, shape index: {}]
  %s3 = inlined_call_operand.vmem [shape: f32[1,128], index: 3, kind: input, shape index: {}]
  %s4 = inlined_call_operand.<no memory space> [shape: f32[1], index: 4, kind: input, shape index: {}]
  %s5 = inlined_call_operand.vmem [shape: f32[8,1], index: 5, kind: output, shape index: {}]
  %s6 = sld [smem:[#allocation0]]
  $region38: #{tpu_custom_call.1} parent=0
    _
  %s8 = ssub.s32 1, %s6
  %s9 = scalar_select 0, %s8, %s6
  %10 = sst [smem:[#allocation2]] %s4
  $region1: #{tpu_custom_call.1} parent=0
    #allocation3 [shape = 'u8[4096]{0}', space=vmem, size = 0x1000, scoped, tag = 'input window, operand 0, single buffered']
    #allocation4 [shape = 's32[1]{0}', space=sflag, size = 0x4, scoped, tag = 'scoped memory for tpu_custom_call.1']
    #allocation5 [shape = 'u8[65536]{0}', space=vmem, size = 0x10000, scoped, tag = 'input window, operand 1, single buffered']
    #allocation6 [shape = 's32[1]{0}', space=sflag, size = 0x4, scoped, tag = 'scoped memory for tpu_custom_call.1']
    %11 = vsyncpa [#allocation4], 0
    %12 = vsyncpa [#allocation6], 0
    // Predicated region
    $region2: #{tpu_custom_call.1} parent=1 // pred_check
      _
    $region3: #{tpu_custom_call.1} parent=1 // pred_check_branch
      %14 = sbr.rel (0) target = $region5
    $region4: #{tpu_custom_call.1} parent=1 // pred_region
      %s16 = ssub.s32 128, 128
      %17 = vsyncadd [#allocation4], %s16
      %s19 = sshll.u32 [#allocation3], 4
      %s20 = int_to_ptr.vmem [resolvable:$true] %s19
      %22 = dma.hbm_to_vmem [thread:$0]  %s0, 128, %s20, [#allocation4]
    $region5: #{tpu_custom_call.1} parent=1 // pred_fallthru
      _
    // Predicated region
    $region6: #{tpu_custom_call.1} parent=1 // pred_check
      _
    $region7: #{tpu_custom_call.1} parent=1 // pred_check_branch
      %24 = sbr.rel (0) target = $region9
    $region8: #{tpu_custom_call.1} parent=1 // pred_region
      %s26 = ssub.s32 2048, 2048
      %27 = vsyncadd [#allocation6], %s26
      %s28 = sshll.u32 [#allocation5], 4
      %s29 = int_to_ptr.vmem [resolvable:$true] %s28
      %34 = dma.hbm_to_vmem [thread:$0]  %s1, 2048, %s29, [#allocation6], 128, 128, 8
    $region9: #{tpu_custom_call.1} parent=1 // pred_fallthru
      _
    // Predicated region
    $region10: #{tpu_custom_call.1} parent=1 // pred_check
      _
    $region11: #{tpu_custom_call.1} parent=1 // pred_check_branch
      %36 = sbr.rel (0) target = $region13
    $region12: #{tpu_custom_call.1} parent=1 // pred_region
      _
    $region13: #{tpu_custom_call.1} parent=1 // pred_fallthru
      _
    // Predicated region
    $region14: #{tpu_custom_call.1} parent=1 // pred_check
      _
    $region15: #{tpu_custom_call.1} parent=1 // pred_check_branch
      %38 = sbr.rel (0) target = $region17
    $region16: #{tpu_custom_call.1} parent=1 // pred_region
      _
    $region17: #{tpu_custom_call.1} parent=1 // pred_fallthru
      _
    // Predicated region
    $region18: #{tpu_custom_call.1} parent=1 // pred_check
      _
    $region19: #{tpu_custom_call.1} parent=1 // pred_check_branch
      %40 = sbr.rel (0) target = $region21
    $region20: #{tpu_custom_call.1} parent=1 // pred_region
      _
    $region21: #{tpu_custom_call.1} parent=1 // pred_fallthru
      _
    // Predicated region
    $region22: #{tpu_custom_call.1} parent=1 // pred_check
      _
    $region23: #{tpu_custom_call.1} parent=1 // pred_check_branch
      %42 = sbr.rel (0) target = $region25
    $region24: #{tpu_custom_call.1} parent=1 // pred_region
      %43 = dma.done [#allocation4], 128
    $region25: #{tpu_custom_call.1} parent=1 // pred_fallthru
      _
    // Predicated region
    $region26: #{tpu_custom_call.1} parent=1 // pred_check
      _
    $region27: #{tpu_custom_call.1} parent=1 // pred_check_branch
      %45 = sbr.rel (0) target = $region29
    $region28: #{tpu_custom_call.1} parent=1 // pred_region
      %46 = dma.done [#allocation6], 2048
    $region29: #{tpu_custom_call.1} parent=1 // pred_fallthru
      _
    %v47 = vld [vmem:[#allocation3] sm:$0xff]
    %v48 = vld [vmem:[#allocation5] sm:$0xff]
    %v49 = vld [vmem:[#allocation5 + $0x8] sm:$0xff]
    %v50 = vld [vmem:[#allocation5 + $0x10] sm:$0xff]
    %v51 = vld [vmem:[#allocation5 + $0x18] sm:$0xff]
    %v52 = vld [vmem:[#allocation5 + $0x20] sm:$0xff]
    %v53 = vld [vmem:[#allocation5 + $0x28] sm:$0xff]
    %v54 = vld [vmem:[#allocation5 + $0x30] sm:$0xff]
    %v55 = vld [vmem:[#allocation5 + $0x38] sm:$0xff]
    %v56 = vld [vmem:[#allocation5 + $0x40] sm:$0xff]
    %v57 = vld [vmem:[#allocation5 + $0x48] sm:$0xff]
    %v58 = vld [vmem:[#allocation5 + $0x50] sm:$0xff]
    %v59 = vld [vmem:[#allocation5 + $0x58] sm:$0xff]
    %v60 = vld [vmem:[#allocation5 + $0x60] sm:$0xff]
    %v61 = vld [vmem:[#allocation5 + $0x68] sm:$0xff]
    %v62 = vld [vmem:[#allocation5 + $0x70] sm:$0xff]
    %v63 = vld [vmem:[#allocation5 + $0x78] sm:$0xff]
    %v64 = vld [vmem:[%s2] sm:$0x1]
    %v66 = vlaneseq
    %v67 = vshrl.u32 %v66, 7
    %v68 = vsub.s32 0, %v67
    %v69 = vrot.slane %v64, %v68
    %71 = vmatprep.subr.mxu0 0.0
    %72 = vmatpush1.msra.mxu0 %v48
    %73 = vmatprep.subr.mxu0 0.0
    %74 = vmatpush1.msra.mxu0 %v49
    %75 = vmatprep.subr.mxu0 0.0
    %76 = vmatpush1.msra.mxu0 %v50
    %77 = vmatprep.subr.mxu0 0.0
    %78 = vmatpush1.msra.mxu0 %v51
    %79 = vmatprep.subr.mxu0 0.0
    %80 = vmatpush1.msra.mxu0 %v52
    %81 = vmatprep.subr.mxu0 0.0
    %82 = vmatpush1.msra.mxu0 %v53
    %83 = vmatprep.subr.mxu0 0.0
    %84 = vmatpush1.msra.mxu0 %v54
    %85 = vmatprep.subr.mxu0 0.0
    %86 = vmatpush1.msra.mxu0 %v55
    %87 = vmatprep.subr.mxu0 0.0
    %88 = vmatpush1.msra.mxu0 %v56
    %89 = vmatprep.subr.mxu0 0.0
    %90 = vmatpush1.msra.mxu0 %v57
    %91 = vmatprep.subr.mxu0 0.0
    %92 = vmatpush1.msra.mxu0 %v58
    %93 = vmatprep.subr.mxu0 0.0
    %94 = vmatpush1.msra.mxu0 %v59
    %95 = vmatprep.subr.mxu0 0.0
    %96 = vmatpush1.msra.mxu0 %v60
    %97 = vmatprep.subr.mxu0 0.0
    %98 = vmatpush1.msra.mxu0 %v61
    %99 = vmatprep.subr.mxu0 0.0
    %100 = vmatpush1.msra.mxu0 %v62
    %101 = vmatprep.subr.mxu0 0.0
    %102 = vmatpush1.msra.mxu0 %v63
    %103 = vmatprep.subr.mxu0 0.0
    %104 = vmatpush1.msra.mxu0 0.0
    %105 = vmatprep.subr.mxu0 0.0
    %106 = vmatpush1.msra.mxu0 0.0
    %107 = vmatprep.subr.mxu0 0.0
    %108 = vmatpush1.msra.mxu0 0.0
    %109 = vmatprep.subr.mxu0 0.0
    %110 = vmatpush1.msra.mxu0 0.0
    %111 = vmatprep.subr.mxu0 0.0
    %112 = vmatpush1.msra.mxu0 0.0
    %113 = vmatprep.subr.mxu0 0.0
    %114 = vmatpush1.msra.mxu0 0.0
    %115 = vmatprep.subr.mxu0 0.0
    %116 = vmatpush1.msra.mxu0 0.0
    %117 = vmatprep.subr.mxu0 0.0
    %118 = vmatpush1.msra.mxu0 0.0
    %119 = vmatprep.subr.mxu0 0.0
    %120 = vmatpush1.msra.mxu0 0.0
    %121 = vmatprep.subr.mxu0 0.0
    %122 = vmatpush1.msra.mxu0 0.0
    %123 = vmatprep.subr.mxu0 0.0
    %124 = vmatpush1.msra.mxu0 0.0
    %125 = vmatprep.subr.mxu0 0.0
    %126 = vmatpush1.msra.mxu0 0.0
    %127 = vmatprep.subr.mxu0 0.0
    %128 = vmatpush1.msra.mxu0 0.0
    %129 = vmatprep.subr.mxu0 0.0
    %130 = vmatpush1.msra.mxu0 0.0
    %131 = vmatprep.subr.mxu0 0.0
    %132 = vmatpush1.msra.mxu0 0.0
    %133 = vmatprep.subr.mxu0 0.0
    %134 = vmatpush1.msra.mxu0 0.0
    %135 = vmatprep.mubr.f32.mxu0 0.0
    %136 = vmatmul.mubr.f32.gmra.mrb[0].mxu0 %v47
    %v137 = vpop.f32.mrb[0].mxu0
    %v138 = vadd.f32 %v69, %v137
    %v139 = vpop.f32.mrb[0].mxu0
    %140 = vdwg.mxu0
    %v141 = vmax.f32 %v138, 0.0
    %v142 = vld [vmem:[%s3] sm:$0x1]
    %v144 = vlaneseq
    %v145 = vshrl.u32 %v144, 7
    %v146 = vsub.s32 0, %v145
    %v147 = vrot.slane %v142, %v146
    %v149 = vmul.f32 %v141, %v147
    %150 = vadd.xlane.f32.xlu0 %v149
    %v151 = vpop.xlane.xlu0 %150
    %s152 = sld [smem:[#allocation2]]
    %v153 = vstv %s152
    %v154 = vadd.f32 %v151, %v153
    %v155 = vxor.u32 %v154, 2147483648
    %v156 = vmul.f32 %v155, 1.442695
    %v157 = vpow.pop %v156
    %v158 = vadd.f32 %v157, 1.0
    %v159 = vrcp.pop %v158
    %v160 = vmul.f32 1.0, %v159
    %vm161 = vcmask 7168
    %162 = vst.msk [vmem:[%s5] sm:$0xff] %vm161, %v160
    // Predicated region
    $region30: #{tpu_custom_call.1} parent=1 // pred_check
      _
    $region31: #{tpu_custom_call.1} parent=1 // pred_check_branch
      %164 = sbr.rel (0) target = $region33
    $region32: #{tpu_custom_call.1} parent=1 // pred_region
      _
    $region33: #{tpu_custom_call.1} parent=1 // pred_fallthru
      _
    // Predicated region
    $region34: #{tpu_custom_call.1} parent=1 // pred_check
      _
    $region35: #{tpu_custom_call.1} parent=1 // pred_check_branch
      %166 = sbr.rel (0) target = $region37
    $region36: #{tpu_custom_call.1} parent=1 // pred_region
      _
    $region37: #{tpu_custom_call.1} parent=1 // pred_fallthru
      _
    %167 = vsyncpa [#allocation4], 1
    %168 = vsyncpa [#allocation6], 1

// kernel: tpu_custom_call.1
$region0: #{tpu_custom_call.1}
  #allocation0 [shape = 'u32[]', space=smem, size = 0x4, offset = 0x4, fixed_abs, tag = 'smem constant byte address 0x4 - core index']
  #allocation1 [shape = 'u32[144,128]{1,0:T(1,128)}', space=vmem, size = 0x12000, scoped, tag = 'internal scratch']
  #allocation2 [shape = 'f32[1]{0:T(128)S(6)}', space=smem, size = 0x200, scoped, tag = 'scoped memory for tpu_custom_call.1']
  %s0 = inlined_call_operand.hbm [shape: f32[8,128], index: 0, kind: input, shape index: {}]
  %s1 = inlined_call_operand.hbm [shape: f32[128,128], index: 1, kind: input, shape index: {}]
  %s2 = inlined_call_operand.vmem [shape: f32[1,128], index: 2, kind: input, shape index: {}]
  %s3 = inlined_call_operand.vmem [shape: f32[1,128], index: 3, kind: input, shape index: {}]
  %s4 = inlined_call_operand.<no memory space> [shape: f32[1], index: 4, kind: input, shape index: {}]
  %s5 = inlined_call_operand.vmem [shape: f32[8,1], index: 5, kind: output, shape index: {}]
  %s6 = sld [smem:[#allocation0]]
  $region38: #{tpu_custom_call.1} parent=0
    _
  %s8 = ssub.s32 1, %s6
  %s9 = scalar_select 0, %s8, %s6
  %10 = sst [smem:[#allocation2]] %s4
  $region1: #{tpu_custom_call.1} parent=0
    #allocation3 [shape = 'u8[4096]{0}', space=vmem, size = 0x1000, scoped, tag = 'input window, operand 0, single buffered']
    #allocation4 [shape = 's32[1]{0}', space=sflag, size = 0x4, scoped, tag = 'scoped memory for tpu_custom_call.1']
    #allocation5 [shape = 'u8[65536]{0}', space=vmem, size = 0x10000, scoped, tag = 'input window, operand 1, single buffered']
    #allocation6 [shape = 's32[1]{0}', space=sflag, size = 0x4, scoped, tag = 'scoped memory for tpu_custom_call.1']
    %11 = vsyncpa [#allocation4], 0
    %12 = vsyncpa [#allocation6], 0
    // Predicated region
    $region2: #{tpu_custom_call.1} parent=1 // pred_check
      _
    $region3: #{tpu_custom_call.1} parent=1 // pred_check_branch
      %14 = sbr.rel (0) target = $region5
    $region4: #{tpu_custom_call.1} parent=1 // pred_region
      %s16 = ssub.s32 128, 128
      %17 = vsyncadd [#allocation4], %s16
      %s19 = sshll.u32 [#allocation3], 4
      %s20 = int_to_ptr.vmem [resolvable:$true] %s19
      %22 = dma.hbm_to_vmem [thread:$0]  %s0, 128, %s20, [#allocation4]
    $region5: #{tpu_custom_call.1} parent=1 // pred_fallthru
      _
    // Predicated region
    $region6: #{tpu_custom_call.1} parent=1 // pred_check
      _
    $region7: #{tpu_custom_call.1} parent=1 // pred_check_branch
      %24 = sbr.rel (0) target = $region9
    $region8: #{tpu_custom_call.1} parent=1 // pred_region
      %s26 = ssub.s32 2048, 2048
      %27 = vsyncadd [#allocation6], %s26
      %s28 = sshll.u32 [#allocation5], 4
      %s29 = int_to_ptr.vmem [resolvable:$true] %s28
      %34 = dma.hbm_to_vmem [thread:$0]  %s1, 2048, %s29, [#allocation6], 128, 128, 8
    $region9: #{tpu_custom_call.1} parent=1 // pred_fallthru
      _
    // Predicated region
    $region10: #{tpu_custom_call.1} parent=1 // pred_check
      _
    $region11: #{tpu_custom_call.1} parent=1 // pred_check_branch
      %36 = sbr.rel (0) target = $region13
    $region12: #{tpu_custom_call.1} parent=1 // pred_region
      _
    $region13: #{tpu_custom_call.1} parent=1 // pred_fallthru
      _
    // Predicated region
    $region14: #{tpu_custom_call.1} parent=1 // pred_check
      _
    $region15: #{tpu_custom_call.1} parent=1 // pred_check_branch
      %38 = sbr.rel (0) target = $region17
    $region16: #{tpu_custom_call.1} parent=1 // pred_region
      _
    $region17: #{tpu_custom_call.1} parent=1 // pred_fallthru
      _
    // Predicated region
    $region18: #{tpu_custom_call.1} parent=1 // pred_check
      _
    $region19: #{tpu_custom_call.1} parent=1 // pred_check_branch
      %40 = sbr.rel (0) target = $region21
    $region20: #{tpu_custom_call.1} parent=1 // pred_region
      _
    $region21: #{tpu_custom_call.1} parent=1 // pred_fallthru
      _
    // Predicated region
    $region22: #{tpu_custom_call.1} parent=1 // pred_check
      _
    $region23: #{tpu_custom_call.1} parent=1 // pred_check_branch
      %42 = sbr.rel (0) target = $region25
    $region24: #{tpu_custom_call.1} parent=1 // pred_region
      %43 = dma.done [#allocation4], 128
    $region25: #{tpu_custom_call.1} parent=1 // pred_fallthru
      _
    // Predicated region
    $region26: #{tpu_custom_call.1} parent=1 // pred_check
      _
    $region27: #{tpu_custom_call.1} parent=1 // pred_check_branch
      %45 = sbr.rel (0) target = $region29
    $region28: #{tpu_custom_call.1} parent=1 // pred_region
      %46 = dma.done [#allocation6], 2048
    $region29: #{tpu_custom_call.1} parent=1 // pred_fallthru
      _
    %v47 = vld [vmem:[#allocation3] sm:$0xff]
    %v48 = vld [vmem:[#allocation5] sm:$0xff]
    %v49 = vld [vmem:[#allocation5 + $0x8] sm:$0xff]
    %v50 = vld [vmem:[#allocation5 + $0x10] sm:$0xff]
    %v51 = vld [vmem:[#allocation5 + $0x18] sm:$0xff]
    %v52 = vld [vmem:[#allocation5 + $0x20] sm:$0xff]
    %v53 = vld [vmem:[#allocation5 + $0x28] sm:$0xff]
    %v54 = vld [vmem:[#allocation5 + $0x30] sm:$0xff]
    %v55 = vld [vmem:[#allocation5 + $0x38] sm:$0xff]
    %v56 = vld [vmem:[#allocation5 + $0x40] sm:$0xff]
    %v57 = vld [vmem:[#allocation5 + $0x48] sm:$0xff]
    %v58 = vld [vmem:[#allocation5 + $0x50] sm:$0xff]
    %v59 = vld [vmem:[#allocation5 + $0x58] sm:$0xff]
    %v60 = vld [vmem:[#allocation5 + $0x60] sm:$0xff]
    %v61 = vld [vmem:[#allocation5 + $0x68] sm:$0xff]
    %v62 = vld [vmem:[#allocation5 + $0x70] sm:$0xff]
    %v63 = vld [vmem:[#allocation5 + $0x78] sm:$0xff]
    %v64 = vld [vmem:[%s2] sm:$0x1]
    %v66 = vlaneseq
    %v67 = vshrl.u32 %v66, 7
    %v68 = vsub.s32 0, %v67
    %v69 = vrot.slane %v64, %v68
    %71 = vmatprep.subr.mxu0 0.0
    %72 = vmatpush1.msra.mxu0 %v48
    %73 = vmatprep.subr.mxu0 0.0
    %74 = vmatpush1.msra.mxu0 %v49
    %75 = vmatprep.subr.mxu0 0.0
    %76 = vmatpush1.msra.mxu0 %v50
    %77 = vmatprep.subr.mxu0 0.0
    %78 = vmatpush1.msra.mxu0 %v51
    %79 = vmatprep.subr.mxu0 0.0
    %80 = vmatpush1.msra.mxu0 %v52
    %81 = vmatprep.subr.mxu0 0.0
    %82 = vmatpush1.msra.mxu0 %v53
    %83 = vmatprep.subr.mxu0 0.0
    %84 = vmatpush1.msra.mxu0 %v54
    %85 = vmatprep.subr.mxu0 0.0
    %86 = vmatpush1.msra.mxu0 %v55
    %87 = vmatprep.subr.mxu0 0.0
    %88 = vmatpush1.msra.mxu0 %v56
    %89 = vmatprep.subr.mxu0 0.0
    %90 = vmatpush1.msra.mxu0 %v57
    %91 = vmatprep.subr.mxu0 0.0
    %92 = vmatpush1.msra.mxu0 %v58
    %93 = vmatprep.subr.mxu0 0.0
    %94 = vmatpush1.msra.mxu0 %v59
    %95 = vmatprep.subr.mxu0 0.0
    %96 = vmatpush1.msra.mxu0 %v60
    %97 = vmatprep.subr.mxu0 0.0
    %98 = vmatpush1.msra.mxu0 %v61
    %99 = vmatprep.subr.mxu0 0.0
    %100 = vmatpush1.msra.mxu0 %v62
    %101 = vmatprep.subr.mxu0 0.0
    %102 = vmatpush1.msra.mxu0 %v63
    %103 = vmatprep.subr.mxu0 0.0
    %104 = vmatpush1.msra.mxu0 0.0
    %105 = vmatprep.subr.mxu0 0.0
    %106 = vmatpush1.msra.mxu0 0.0
    %107 = vmatprep.subr.mxu0 0.0
    %108 = vmatpush1.msra.mxu0 0.0
    %109 = vmatprep.subr.mxu0 0.0
    %110 = vmatpush1.msra.mxu0 0.0
    %111 = vmatprep.subr.mxu0 0.0
    %112 = vmatpush1.msra.mxu0 0.0
    %113 = vmatprep.subr.mxu0 0.0
    %114 = vmatpush1.msra.mxu0 0.0
    %115 = vmatprep.subr.mxu0 0.0
    %116 = vmatpush1.msra.mxu0 0.0
    %117 = vmatprep.subr.mxu0 0.0
    %118 = vmatpush1.msra.mxu0 0.0
    %119 = vmatprep.subr.mxu0 0.0
    %120 = vmatpush1.msra.mxu0 0.0
    %121 = vmatprep.subr.mxu0 0.0
    %122 = vmatpush1.msra.mxu0 0.0
    %123 = vmatprep.subr.mxu0 0.0
    %124 = vmatpush1.msra.mxu0 0.0
    %125 = vmatprep.subr.mxu0 0.0
    %126 = vmatpush1.msra.mxu0 0.0
    %127 = vmatprep.subr.mxu0 0.0
    %128 = vmatpush1.msra.mxu0 0.0
    %129 = vmatprep.subr.mxu0 0.0
    %130 = vmatpush1.msra.mxu0 0.0
    %131 = vmatprep.subr.mxu0 0.0
    %132 = vmatpush1.msra.mxu0 0.0
    %133 = vmatprep.subr.mxu0 0.0
    %134 = vmatpush1.msra.mxu0 0.0
    %135 = vmatprep.mubr.f32.mxu0 0.0
    %136 = vmatmul.mubr.f32.gmra.mrb[0].mxu0 %v47
    %v137 = vpop.f32.mrb[0].mxu0
    %v138 = vadd.f32 %v69, %v137
    %v139 = vpop.f32.mrb[0].mxu0
    %140 = vdwg.mxu0
    %v141 = vmax.f32 %v138, 0.0
    %v142 = vld [vmem:[%s3] sm:$0x1]
    %v144 = vlaneseq
    %v145 = vshrl.u32 %v144, 7
    %v146 = vsub.s32 0, %v145
    %v147 = vrot.slane %v142, %v146
    %v149 = vmul.f32 %v141, %v147
    %150 = vadd.xlane.f32.xlu0 %v149
    %v151 = vpop.xlane.xlu0 %150
    %s152 = sld [smem:[#allocation2]]
    %v153 = vstv %s152
    %v154 = vadd.f32 %v151, %v153
    %v155 = vxor.u32 %v154, 2147483648
    %v156 = vmul.f32 %v155, 1.442695
    %v157 = vpow.pop %v156
    %v158 = vadd.f32 %v157, 1.0
    %v159 = vrcp.pop %v158
    %v160 = vmul.f32 1.0, %v159
    %vm161 = vcmask 7168
    %162 = vst.msk [vmem:[%s5] sm:$0xff] %vm161, %v160
    // Predicated region
    $region30: #{tpu_custom_call.1} parent=1 // pred_check
      _
    $region31: #{tpu_custom_call.1} parent=1 // pred_check_branch
      %164 = sbr.rel (0) target = $region33
    $region32: #{tpu_custom_call.1} parent=1 // pred_region
      _
    $region33: #{tpu_custom_call.1} parent=1 // pred_fallthru
      _
    // Predicated region
    $region34: #{tpu_custom_call.1} parent=1 // pred_check
      _
    $region35: #{tpu_custom_call.1} parent=1 // pred_check_branch
      %166 = sbr.rel (0) target = $region37
    $region36: #{tpu_custom_call.1} parent=1 // pred_region
      _
    $region37: #{tpu_custom_call.1} parent=1 // pred_fallthru
      _
    %167 = vsyncpa [#allocation4], 1
    %168 = vsyncpa [#allocation6], 1

</llo_original>
